<compile_context>
chip_gen: v6e
topology: v6e:2x2x1
jax: 0.10.0
libtpu: 0.0.40
codegen_flags: <defaults>
</compile_context>

<pallas_src>
import functools

import jax
import jax.numpy as jnp
from jax.experimental import pallas as pl
from jax.experimental.pallas import tpu as pltpu


def _round_up(x, m):
    return (x + m - 1) // m * m


def _conv_reg_kernel(a_ref, w_ref, b_ref, o_ref, *, shift, m_out):
    """Per-batch fused conv-as-matmul.

    a_ref: (1, 6C, R)   channel-major patches; R = (OH+1)*OW_pad rows on lanes,
                        channels ordered (di, kw, c)  (row-pair parity, width tap, chan)
    w_ref: (2, OC, 6C)  row taps Di=0,1 (kh = 2*Di + di, zero-padded where kh > 2)
    b_ref: (OC, 1)      bias (broadcast along lanes)
    o_ref: (1, OC, M)   M = OH*OW_pad; already NCHW-ordered, lane-dense
    """
    a = a_ref[0]                                                      # (6C, R)
    # Two row-tap matmuls over the full row grid (incl. halo row), f32 accum.
    y0 = jnp.dot(w_ref[0], a, preferred_element_type=jnp.float32)    # (OC, R)
    y1 = jnp.dot(w_ref[1], a, preferred_element_type=jnp.float32)    # (OC, R)
    # out[:, oh*OWp + ow] = y0[:, oh*OWp + ow] + y1[:, (oh+1)*OWp + ow] + bias
    out = y0[:, 0:m_out] + y1[:, shift:shift + m_out] + b_ref[...]
    o_ref[0] = out.astype(o_ref.dtype)


def conv_reg_forward(x_nchw, weight_oihw, bias, *, stride=2, padding=1):
    """ConvReg.forward for the Conv2d(k=3, s=2, p=1) branch.

    x_nchw:      (N, C, H, W)     float32
    weight_oihw: (OC, C, 3, 3)    float32  (PyTorch OIHW layout)
    bias:        (OC,)            float32
    returns:     (N, OC, H//2, W//2)  float32 (NCHW)
    """
    N, C, H, W = x_nchw.shape
    OC, Cw, KH, KW = weight_oihw.shape
    assert (KH, KW) == (3, 3) and stride == 2 and padding == 1 and Cw == C
    assert H % 2 == 0 and W % 2 == 0
    OH = (H + 2 * padding - KH) // stride + 1      # = H // 2
    OW = (W + 2 * padding - KW) // stride + 1      # = W // 2

    OW_pad = _round_up(OW, 8)          # keep row-grid shifts sublane/tap aligned
    R = (OH + 1) * OW_pad              # row grid incl. bottom halo row (Di=1)
    M = OH * OW_pad                    # rows carrying real outputs
    K6 = 6 * C                         # (di, kw, c) packed channels

    # ---------------- glue: fused-im2col restructuring (no 9x blowup) ----------------
    x = jnp.transpose(x_nchw, (0, 2, 3, 1))                              # NHWC
    xp = jnp.pad(x, ((0, 0), (padding, padding), (padding, padding), (0, 0)))
    # width taps kw=0..2 folded into channels via stride-2 views (~1.5x, not 9x)
    cols = [xp[:, :, kw:kw + stride * OW:stride, :] for kw in range(KW)]  # (N,H+2,OW,C)
    aw = jnp.stack(cols, axis=3)                                          # (N,H+2,OW,3,C)
    aw = aw.reshape(N, OH + 1, 2, OW, KW * C)                             # (n,i,di,ow,(kw,c))
    a = jnp.transpose(aw, (0, 1, 3, 2, 4)).reshape(N, OH + 1, OW, K6)     # chans (di,kw,c)
    if OW_pad > OW:
        a = jnp.pad(a, ((0, 0), (0, 0), (0, OW_pad - OW), (0, 0)))
    a = a.reshape(N, R, K6)
    a_t = jnp.transpose(a, (0, 2, 1))                                     # (N, 6C, R)

    # weights: (OC,C,3,3) -> two row taps, each (OC, 6C) with (di,kw,c) K order
    w = jnp.transpose(weight_oihw, (2, 3, 1, 0))                          # (kh,kw,C,OC)
    w = jnp.pad(w, ((0, 1), (0, 0), (0, 0), (0, 0)))                      # kh -> 4 (kh=3 zero)
    w = w.reshape(2, 2 * KW * C, OC)                                      # (Di,(di,kw,c),OC)
    w_t = jnp.transpose(w, (0, 2, 1))                                     # (2, OC, 6C)
    b_col = bias.reshape(OC, 1)

    kernel = functools.partial(_conv_reg_kernel, shift=OW_pad, m_out=M)

    out = pl.pallas_call(
        kernel,
        out_shape=jax.ShapeDtypeStruct((N, OC, M), x_nchw.dtype),
        grid_spec=pltpu.PrefetchScalarGridSpec(
            num_scalar_prefetch=0,
            grid=(N,),
            in_specs=[
                pl.BlockSpec((1, K6, R), lambda n: (n, 0, 0)),
                pl.BlockSpec((2, OC, K6), lambda n: (0, 0, 0)),
                pl.BlockSpec((OC, 1), lambda n: (0, 0)),
            ],
            out_specs=pl.BlockSpec((1, OC, M), lambda n: (n, 0, 0)),
        ),
        compiler_params=pltpu.CompilerParams(
            dimension_semantics=("parallel",),
            vmem_limit_bytes=48 * 1024 * 1024,
        ),
    )(a_t, w_t, b_col)

    # (N, OC, M) is already NCHW-ordered: reshape + strip the OW padding.
    out = out.reshape(N, OC, OH, OW_pad)[:, :, :, :OW]
    return out


if __name__ == "__main__":
    # s_shape = (2, 4, 16, 16), t_shape = (2, 8, 8, 8), factor = 1
    #   -> s_H == 2 * t_H  -> Conv2d(4, 8, kernel_size=3, stride=2, padding=1)
    N, C, H, W = 2, 4, 16, 16
    OC, KH, KW = 8, 3, 3

    key = jax.random.PRNGKey(0)
    kx, kw_, kb = jax.random.split(key, 3)
    x = jax.random.normal(kx, (N, C, H, W), dtype=jnp.float32)
    fan_in = C * KH * KW
    bound = 1.0 / (fan_in ** 0.5)
    weight = jax.random.uniform(kw_, (OC, C, KH, KW), jnp.float32, -bound, bound)
    bias = jax.random.uniform(kb, (OC,), jnp.float32, -bound, bound)

    fwd = jax.jit(conv_reg_forward)
    y = fwd(x, weight, bias)
    y = jax.block_until_ready(y)

    # reference conv (plain XLA) for a sanity check
    y_ref = jax.lax.conv_general_dilated(
        x, weight, window_strides=(2, 2), padding=((1, 1), (1, 1)),
        dimension_numbers=("NCHW", "OIHW", "NCHW")) + bias.reshape(1, OC, 1, 1)

    assert y.shape == (N, OC, H // 2, W // 2)
    err = float(jnp.max(jnp.abs(y - y_ref)))
    assert jnp.allclose(y, y_ref, atol=1e-4, rtol=1e-4), err

    print("KERNEL_OK")
</pallas_src>

<mosaic_0001>
module attributes {stable_mosaic.version = 11 : i64} {
  func.func @_conv_reg_kernel(%arg0: i32, %arg1: memref<1x24x72xf32, #tpu.memory_space<vmem>>, %arg2: memref<2x8x24xf32, #tpu.memory_space<vmem>>, %arg3: memref<8x1xf32, #tpu.memory_space<vmem>>, %arg4: memref<1x8x64xf32, #tpu.memory_space<vmem>>) attributes {dimension_semantics = [#tpu.dimension_semantics<parallel>], iteration_bounds = array<i64: 2>, scalar_prefetch = 0 : i64, scratch_operands = 0 : i64, tpu.core_type = #tpu.core_type<tc>, window_params = [{transform_indices = @transform_0, window_bounds = array<i64: 1, 24, 72>}, {pipeline_mode = #tpu.pipeline_mode<synchronous>, transform_indices = @transform_1, window_bounds = array<i64: 2, 8, 24>}, {pipeline_mode = #tpu.pipeline_mode<synchronous>, transform_indices = @transform_2, window_bounds = array<i64: 8, 1>}, {transform_indices = @transform_3, window_bounds = array<i64: 1, 8, 64>}]} {
    %c0 = arith.constant 0 : index
    %c0_0 = arith.constant 0 : index
    %c0_1 = arith.constant 0 : index
    %0 = vector.load %arg1[%c0, %c0_0, %c0_1] : memref<1x24x72xf32, #tpu.memory_space<vmem>>, vector<1x24x72xf32>
    %1 = vector.shape_cast %0 : vector<1x24x72xf32> to vector<24x72xf32>
    %c0_2 = arith.constant 0 : index
    %c0_3 = arith.constant 0 : index
    %c0_4 = arith.constant 0 : index
    %2 = vector.load %arg2[%c0_2, %c0_3, %c0_4] : memref<2x8x24xf32, #tpu.memory_space<vmem>>, vector<1x8x24xf32>
    %3 = vector.shape_cast %2 : vector<1x8x24xf32> to vector<8x24xf32>
    %cst = arith.constant dense<0.000000e+00> : vector<8x72xf32>
    %4 = tpu.matmul %3, %1, %cst {dimension_numbers = #tpu.dot_dimension_numbers<[1], [0], [0], [1], [0, 0, 1, 1], [], []>} : vector<8x24xf32>, vector<24x72xf32>, vector<8x72xf32> -> vector<8x72xf32>
    %c1 = arith.constant 1 : index
    %c0_5 = arith.constant 0 : index
    %c0_6 = arith.constant 0 : index
    %5 = vector.load %arg2[%c1, %c0_5, %c0_6] : memref<2x8x24xf32, #tpu.memory_space<vmem>>, vector<1x8x24xf32>
    %6 = vector.shape_cast %5 : vector<1x8x24xf32> to vector<8x24xf32>
    %cst_7 = arith.constant dense<0.000000e+00> : vector<8x72xf32>
    %7 = tpu.matmul %6, %1, %cst_7 {dimension_numbers = #tpu.dot_dimension_numbers<[1], [0], [0], [1], [0, 0, 1, 1], [], []>} : vector<8x24xf32>, vector<24x72xf32>, vector<8x72xf32> -> vector<8x72xf32>
    %8 = vector.extract_strided_slice %4 {offsets = [0, 0], sizes = [8, 64], strides = [1, 1]} : vector<8x72xf32> to vector<8x64xf32>
    %9 = vector.extract_strided_slice %7 {offsets = [0, 8], sizes = [8, 64], strides = [1, 1]} : vector<8x72xf32> to vector<8x64xf32>
    %10 = arith.addf %8, %9 : vector<8x64xf32>
    %c0_8 = arith.constant 0 : index
    %c0_9 = arith.constant 0 : index
    %11 = vector.load %arg3[%c0_8, %c0_9] : memref<8x1xf32, #tpu.memory_space<vmem>>, vector<8x1xf32>
    %12 = vector.broadcast %11 : vector<8x1xf32> to vector<8x64xf32>
    %13 = arith.addf %10, %12 : vector<8x64xf32>
    %c0_10 = arith.constant 0 : index
    %c0_11 = arith.constant 0 : index
    %c0_12 = arith.constant 0 : index
    %14 = vector.load %arg4[%c0_10, %c0_11, %c0_12] : memref<1x8x64xf32, #tpu.memory_space<vmem>>, vector<1x8x64xf32>
    %15 = vector.shape_cast %14 : vector<1x8x64xf32> to vector<8x64xf32>
    %16 = vector.shape_cast %13 : vector<8x64xf32> to vector<1x8x64xf32>
    tpu.vector_store %arg4[%c0_10, %c0_11, %c0_12], %16 {strides = array<i32>} : memref<1x8x64xf32, #tpu.memory_space<vmem>>, vector<1x8x64xf32>,
    return
  }
  func.func @transform_0(%arg0: i32) -> (i32, i32, i32) {
    %c0_i32 = arith.constant 0 : i32
    %c0_i32_0 = arith.constant 0 : i32
    %c0_i32_1 = arith.constant 0 : i32
    return %arg0, %c0_i32, %c0_i32_0 : i32, i32, i32
  }
  func.func @transform_1(%arg0: i32) -> (i32, i32, i32) {
    %c0_i32 = arith.constant 0 : i32
    %c0_i32_0 = arith.constant 0 : i32
    %c0_i32_1 = arith.constant 0 : i32
    %c0_i32_2 = arith.constant 0 : i32
    return %c0_i32, %c0_i32_0, %c0_i32_1 : i32, i32, i32
  }
  func.func @transform_2(%arg0: i32) -> (i32, i32) {
    %c0_i32 = arith.constant 0 : i32
    %c0_i32_0 = arith.constant 0 : i32
    %c0_i32_1 = arith.constant 0 : i32
    return %c0_i32, %c0_i32_0 : i32, i32
  }
  func.func @transform_3(%arg0: i32) -> (i32, i32, i32) {
    %c0_i32 = arith.constant 0 : i32
    %c0_i32_0 = arith.constant 0 : i32
    %c0_i32_1 = arith.constant 0 : i32
    return %arg0, %c0_i32, %c0_i32_0 : i32, i32, i32
  }
}

</mosaic_0001>

<llo_original>
// kernel: conv_reg_forward.1
$region0: #{conv_reg_forward.1}
  #allocation0 [shape = 'u32[]', space=smem, size = 0x4, offset = 0x4, fixed_abs, tag = 'smem constant byte address 0x4 - core index']
  #allocation1 [shape = 'u32[144,128]{1,0:T(1,128)}', space=vmem, size = 0x12000, scoped, tag = 'internal scratch']
  %s0 = inlined_call_operand.vmem [shape: f32[2,24,72], index: 0, kind: input, shape index: {}]
  %s1 = inlined_call_operand.vmem [shape: f32[2,8,24], index: 1, kind: input, shape index: {}]
  %s2 = inlined_call_operand.vmem [shape: f32[8,1], index: 2, kind: input, shape index: {}]
  %s3 = inlined_call_operand.vmem [shape: f32[2,8,64], index: 3, kind: output, shape index: {}]
  %s4 = sld [smem:[#allocation0]]
  $region45: #{conv_reg_forward.1} parent=0
    _
  %s6 = ssub.s32 1, %s4
  %s7 = scalar_select 0, %s6, %s4
  loop: start=0, step=1, limit=4
  $region2: #{conv_reg_forward.1} parent=0 // loop_pre_header
    _
  $region3: #{conv_reg_forward.1} parent=0 // loop_header
    %s9 = sphi 0, %s13
    %p10 = scmp.ge.s32.totalorder %s9, 4
    %s19 = sphi 0, %s21
    %s22 = sphi 0, %s19
    %s23 = sphi 0, %s22
    %s39 = sphi 0, %s23
    %s43 = sphi 0, %s43
    %s45 = sphi 0, %s43
    %s46 = sphi 0, %s45
    %s60 = sphi 0, %s46
    %s64 = sphi 0, %s64
    %s66 = sphi 0, %s64
    %s67 = sphi 0, %s66
    %s81 = sphi 0, %s67
    %s87 = sphi 0, %s89
    %s90 = sphi 0, %s87
    %s91 = sphi 0, %s90
    %s107 = sphi 0, %s91
  $region4: #{conv_reg_forward.1} parent=0 // loop_header_branch
    %12 = sbr.rel (%p10) target = $region8
  $region5: #{conv_reg_forward.1} parent=0 // loop_body
    %s14 = ssub.s32 %s9, 1
    %s15 = ssub.s32 %s9, 2
    %s16 = sadd.s32 %s9, 1
    %s17 = ssub.s32 %s9, %s16
    %p18 = scmp.eq.s32.totalorder %s17, 0
    %s20 = sadd.s32 %s19, 1
    %s21 = scalar_select %p18, %s19, %s20
    %p24 = pneg %p18
    %p25 = scmp.eq.s32.totalorder %s9, 1
    %p26 = por %p24, %p25
    %p27 = scmp.ne.s32.totalorder %s19, %s22
    %p28 = scmp.eq.s32.totalorder %s9, 0
    %p29 = por %p27, %p28
    %p30 = scmp.ne.s32.totalorder %s19, %s22
    %p31 = scmp.eq.s32.totalorder %s14, 1
    %p32 = por %p30, %p31
    %p33 = scmp.ne.s32.totalorder %s22, %s23
    %p34 = scmp.eq.s32.totalorder %s14, 0
    %p35 = por %p33, %p34
    %p36 = scmp.ne.s32.totalorder %s22, %s23
    %p37 = scmp.eq.s32.totalorder %s15, 1
    %p38 = por %p36, %p37
    %p40 = scmp.ne.s32.totalorder %s23, %s39
    %p41 = scmp.eq.s32.totalorder %s15, 0
    %p42 = por %p40, %p41
    %s44 = sadd.s32 %s43, 1
    %p47 = scmp.eq.s32.totalorder %s9, 1
    %p48 = scmp.ne.s32.totalorder %s43, %s45
    %p49 = scmp.eq.s32.totalorder %s9, 0
    %p50 = por %p48, %p49
    %p51 = scmp.ne.s32.totalorder %s43, %s45
    %p52 = scmp.eq.s32.totalorder %s14, 1
    %p53 = por %p51, %p52
    %p54 = scmp.ne.s32.totalorder %s45, %s46
    %p55 = scmp.eq.s32.totalorder %s14, 0
    %p56 = por %p54, %p55
    %p57 = scmp.ne.s32.totalorder %s45, %s46
    %p58 = scmp.eq.s32.totalorder %s15, 1
    %p59 = por %p57, %p58
    %p61 = scmp.ne.s32.totalorder %s46, %s60
    %p62 = scmp.eq.s32.totalorder %s15, 0
    %p63 = por %p61, %p62
    %s65 = sadd.s32 %s64, 1
    %p68 = scmp.eq.s32.totalorder %s9, 1
    %p69 = scmp.ne.s32.totalorder %s64, %s66
    %p70 = scmp.eq.s32.totalorder %s9, 0
    %p71 = por %p69, %p70
    %p72 = scmp.ne.s32.totalorder %s64, %s66
    %p73 = scmp.eq.s32.totalorder %s14, 1
    %p74 = por %p72, %p73
    %p75 = scmp.ne.s32.totalorder %s66, %s67
    %p76 = scmp.eq.s32.totalorder %s14, 0
    %p77 = por %p75, %p76
    %p78 = scmp.ne.s32.totalorder %s66, %s67
    %p79 = scmp.eq.s32.totalorder %s15, 1
    %p80 = por %p78, %p79
    %p82 = scmp.ne.s32.totalorder %s67, %s81
    %p83 = scmp.eq.s32.totalorder %s15, 0
    %p84 = por %p82, %p83
    %s85 = ssub.s32 %s9, %s16
    %p86 = scmp.eq.s32.totalorder %s85, 0
    %s88 = sadd.s32 %s87, 1
    %s89 = scalar_select %p86, %s87, %s88
    %p92 = pneg %p86
    %p93 = scmp.eq.s32.totalorder %s9, 1
    %p94 = por %p92, %p93
    %p95 = scmp.ne.s32.totalorder %s87, %s90
    %p96 = scmp.eq.s32.totalorder %s9, 0
    %p97 = por %p95, %p96
    %p98 = scmp.ne.s32.totalorder %s87, %s90
    %p99 = scmp.eq.s32.totalorder %s14, 1
    %p100 = por %p98, %p99
    %p101 = scmp.ne.s32.totalorder %s90, %s91
    %p102 = scmp.eq.s32.totalorder %s14, 0
    %p103 = por %p101, %p102
    %p104 = scmp.ne.s32.totalorder %s90, %s91
    %p105 = scmp.eq.s32.totalorder %s15, 1
    %p106 = por %p104, %p105
    %p108 = scmp.ne.s32.totalorder %s91, %s107
    %p109 = scmp.eq.s32.totalorder %s15, 0
    %p110 = por %p108, %p109
    %p111 = scmp.le.s32.totalorder 1, %s9
    %p112 = scmp.lt.s32.totalorder %s9, 3
    %p113 = pnand %p111, %p112
    %p114 = pneg %p113
    // Predicated region
    $region9: #{conv_reg_forward.1} parent=5 // pred_check
      _
    $region10: #{conv_reg_forward.1} parent=5 // pred_check_branch
      %116 = sbr.rel (%p113) target = $region12
    $region11: #{conv_reg_forward.1} parent=5 // pred_region
      %s117 = ssub.s32 %s9, 1
      // Predicated region
      $region13: #{conv_reg_forward.1} parent=11 // pred_check
        %p118 = pneg %p56
      $region14: #{conv_reg_forward.1} parent=11 // pred_check_branch
        %120 = sbr.rel (%p118) target = $region16
      $region15: #{conv_reg_forward.1} parent=11 // pred_region
        _
      $region16: #{conv_reg_forward.1} parent=11 // pred_fallthru
        _
      // Predicated region
      $region17: #{conv_reg_forward.1} parent=11 // pred_check
        %p121 = pneg %p77
      $region18: #{conv_reg_forward.1} parent=11 // pred_check_branch
        %123 = sbr.rel (%p121) target = $region20
      $region19: #{conv_reg_forward.1} parent=11 // pred_region
        _
      $region20: #{conv_reg_forward.1} parent=11 // pred_fallthru
        _
    $region12: #{conv_reg_forward.1} parent=5 // pred_fallthru
      _
    %p124 = scmp.lt.s32.totalorder %s9, 2
    // Predicated region
    $region21: #{conv_reg_forward.1} parent=5 // pred_check
      %p125 = pneg %p124
    $region22: #{conv_reg_forward.1} parent=5 // pred_check_branch
      %127 = sbr.rel (%p125) target = $region24
    $region23: #{conv_reg_forward.1} parent=5 // pred_region
      // Predicated region
      $region25: #{conv_reg_forward.1} parent=23 // pred_check
        %p128 = pneg %p29
      $region26: #{conv_reg_forward.1} parent=23 // pred_check_branch
        %130 = sbr.rel (%p128) target = $region28
      $region27: #{conv_reg_forward.1} parent=23 // pred_region
        %p131 = scmp.lt.s32.totalorder %s9, 1
        %s132 = scalar_select %p131, %s9, 1
        %s133 = smul.addr %s132, 3
        %s134 = smul.addr %s133, 8
        %s135 = scalar_lea.vmem %s0, %s134
      $region28: #{conv_reg_forward.1} parent=23 // pred_fallthru
        _
    $region24: #{conv_reg_forward.1} parent=5 // pred_fallthru
      _
    %p136 = scmp.le.s32.totalorder 1, %s9
    %p137 = scmp.lt.s32.totalorder %s9, 3
    %p138 = pnand %p136, %p137
    %p139 = pneg %p138
    // Predicated region
    $region29: #{conv_reg_forward.1} parent=5 // pred_check
      _
    $region30: #{conv_reg_forward.1} parent=5 // pred_check_branch
      %141 = sbr.rel (%p138) target = $region32
    $region31: #{conv_reg_forward.1} parent=5 // pred_region
      %s142 = ssub.s32 %s9, 1
      %p143 = scmp.lt.s32.totalorder %s14, 1
      %s144 = scalar_select %p143, %s14, 1
      %s145 = smul.addr %s144, 3
      %s146 = smul.addr %s145, 8
      %s147 = scalar_lea.vmem %s0, %s146
      %p148 = pneg %p35
      %p149 = pneg %p32
      %p150 = pneg %p56
      %p151 = pneg %p53
      %p152 = pneg %p77
      %p153 = pneg %p74
      %p154 = pneg %p103
      %p155 = pneg %p100
      %p156 = scmp.lt.s32.totalorder %s14, 1
      %s157 = scalar_select %p156, %s14, 1
      %s158 = smul.addr %s157, 8
      %s159 = scalar_lea.vmem %s3, %s158
      %p160 = scmp.lt.s32.totalorder %s14, 1
      %s161 = scalar_select %p160, %s14, 1
      %s162 = smul.addr %s161, 3
      %s163 = smul.addr %s162, 8
      %s164 = scalar_lea.vmem %s0, %s163
      %p165 = scmp.lt.s32.totalorder %s14, 1
      %s166 = scalar_select %p165, %s14, 1
      %s167 = smul.addr %s166, 8
      %s168 = scalar_lea.vmem %s3, %s167
      %v169 = vld [vmem:[%s164] sm:$0xff]
      %v170 = vld [vmem:[%s164 + $0x8] sm:$0xff]
      %v171 = vld [vmem:[%s164 + $0x10] sm:$0xff]
      %v172 = vld [vmem:[%s1] sm:$0xff]
      %vm173 = vcmask 195584
      %v175 = vsel %vm173, %v172, 0
      %177 = vmatprep.subr.mxu0 0.0
      %178 = vmatpush1.msra.mxu0 0.0
      %179 = vmatprep.subr.mxu0 0.0
      %180 = vmatpush1.msra.mxu0 0.0
      %181 = vmatprep.subr.mxu0 0.0
      %182 = vmatpush1.msra.mxu0 0.0
      %183 = vmatprep.subr.mxu0 0.0
      %184 = vmatpush1.msra.mxu0 0.0
      %185 = vmatprep.subr.mxu0 0.0
      %186 = vmatpush1.msra.mxu0 0.0
      %187 = vmatprep.subr.mxu0 0.0
      %188 = vmatpush1.msra.mxu0 0.0
      %189 = vmatprep.subr.mxu0 0.0
      %190 = vmatpush1.msra.mxu0 0.0
      %191 = vmatprep.subr.mxu0 0.0
      %192 = vmatpush1.msra.mxu0 0.0
      %193 = vmatprep.subr.mxu0 0.0
      %194 = vmatpush1.msra.mxu0 0.0
      %195 = vmatprep.subr.mxu0 0.0
      %196 = vmatpush1.msra.mxu0 0.0
      %197 = vmatprep.subr.mxu0 0.0
      %198 = vmatpush1.msra.mxu0 0.0
      %199 = vmatprep.subr.mxu0 0.0
      %200 = vmatpush1.msra.mxu0 0.0
      %201 = vmatprep.subr.mxu0 0.0
      %202 = vmatpush1.msra.mxu0 0.0
      %203 = vmatprep.subr.mxu0 0.0
      %204 = vmatpush1.msra.mxu0 %v171
      %205 = vmatprep.subr.mxu0 0.0
      %206 = vmatpush1.msra.mxu0 %v170
      %207 = vmatprep.subr.mxu0 0.0
      %208 = vmatpush1.msra.mxu0 %v169
      %209 = vmatprep.subr.mxu0 0.0
      %210 = vmatpush2.msra.mxu0 0.0
      %211 = vmatprep.subr.mxu0 0.0
      %212 = vmatpush2.msra.mxu0 0.0
      %213 = vmatprep.subr.mxu0 0.0
      %214 = vmatpush2.msra.mxu0 0.0
      %215 = vmatprep.subr.mxu0 0.0
      %216 = vmatpush2.msra.mxu0 0.0
      %217 = vmatprep.subr.mxu0 0.0
      %218 = vmatpush2.msra.mxu0 0.0
      %219 = vmatprep.subr.mxu0 0.0
      %220 = vmatpush2.msra.mxu0 0.0
      %221 = vmatprep.subr.mxu0 0.0
      %222 = vmatpush2.msra.mxu0 0.0
      %223 = vmatprep.subr.mxu0 0.0
      %224 = vmatpush2.msra.mxu0 0.0
      %225 = vmatprep.subr.mxu0 0.0
      %226 = vmatpush2.msra.mxu0 0.0
      %227 = vmatprep.subr.mxu0 0.0
      %228 = vmatpush2.msra.mxu0 0.0
      %229 = vmatprep.subr.mxu0 0.0
      %230 = vmatpush2.msra.mxu0 0.0
      %231 = vmatprep.subr.mxu0 0.0
      %232 = vmatpush2.msra.mxu0 0.0
      %233 = vmatprep.subr.mxu0 0.0
      %234 = vmatpush2.msra.mxu0 0.0
      %235 = vmatprep.subr.mxu0 0.0
      %236 = vmatpush2.msra.mxu0 0.0
      %237 = vmatprep.subr.mxu0 0.0
      %238 = vmatpush2.msra.mxu0 0.0
      %239 = vmatprep.subr.mxu0 0.0
      %240 = vmatpush2.msra.mxu0 0.0
      %241 = vmatprep.mubr.f32.mxu0 0.0
      %242 = vmatmul.mubr.f32.gmra.mxu0 %v175
      %v243 = vpop.f32.mrf.mxu0
      %v244 = vadd.f32 0.0, %v243
      %v245 = vpop.f32.mrf.mxu0
      %246 = vdwg.mxu0
      %s247 = scalar_lea.vmem %s1, 8
      %v248 = vld [vmem:[%s247] sm:$0xff]
      %v250 = vsel %vm173, %v248, 0
      %252 = vmatprep.subr.mxu0 0.0
      %253 = vmatpush1.msra.mxu0 0.0
      %254 = vmatprep.subr.mxu0 0.0
      %255 = vmatpush1.msra.mxu0 0.0
      %256 = vmatprep.subr.mxu0 0.0
      %257 = vmatpush1.msra.mxu0 0.0
      %258 = vmatprep.subr.mxu0 0.0
      %259 = vmatpush1.msra.mxu0 0.0
      %260 = vmatprep.subr.mxu0 0.0
      %261 = vmatpush1.msra.mxu0 0.0
      %262 = vmatprep.subr.mxu0 0.0
      %263 = vmatpush1.msra.mxu0 0.0
      %264 = vmatprep.subr.mxu0 0.0
      %265 = vmatpush1.msra.mxu0 0.0
      %266 = vmatprep.subr.mxu0 0.0
      %267 = vmatpush1.msra.mxu0 0.0
      %268 = vmatprep.subr.mxu0 0.0
      %269 = vmatpush1.msra.mxu0 0.0
      %270 = vmatprep.subr.mxu0 0.0
      %271 = vmatpush1.msra.mxu0 0.0
      %272 = vmatprep.subr.mxu0 0.0
      %273 = vmatpush1.msra.mxu0 0.0
      %274 = vmatprep.subr.mxu0 0.0
      %275 = vmatpush1.msra.mxu0 0.0
      %276 = vmatprep.subr.mxu0 0.0
      %277 = vmatpush1.msra.mxu0 0.0
      %278 = vmatprep.subr.mxu0 0.0
      %279 = vmatpush1.msra.mxu0 %v171
      %280 = vmatprep.subr.mxu0 0.0
      %281 = vmatpush1.msra.mxu0 %v170
      %282 = vmatprep.subr.mxu0 0.0
      %283 = vmatpush1.msra.mxu0 %v169
      %284 = vmatprep.subr.mxu0 0.0
      %285 = vmatpush2.msra.mxu0 0.0
      %286 = vmatprep.subr.mxu0 0.0
      %287 = vmatpush2.msra.mxu0 0.0
      %288 = vmatprep.subr.mxu0 0.0
      %289 = vmatpush2.msra.mxu0 0.0
      %290 = vmatprep.subr.mxu0 0.0
      %291 = vmatpush2.msra.mxu0 0.0
      %292 = vmatprep.subr.mxu0 0.0
      %293 = vmatpush2.msra.mxu0 0.0
      %294 = vmatprep.subr.mxu0 0.0
      %295 = vmatpush2.msra.mxu0 0.0
      %296 = vmatprep.subr.mxu0 0.0
      %297 = vmatpush2.msra.mxu0 0.0
      %298 = vmatprep.subr.mxu0 0.0
      %299 = vmatpush2.msra.mxu0 0.0
      %300 = vmatprep.subr.mxu0 0.0
      %301 = vmatpush2.msra.mxu0 0.0
      %302 = vmatprep.subr.mxu0 0.0
      %303 = vmatpush2.msra.mxu0 0.0
      %304 = vmatprep.subr.mxu0 0.0
      %305 = vmatpush2.msra.mxu0 0.0
      %306 = vmatprep.subr.mxu0 0.0
      %307 = vmatpush2.msra.mxu0 0.0
      %308 = vmatprep.subr.mxu0 0.0
      %309 = vmatpush2.msra.mxu0 0.0
      %310 = vmatprep.subr.mxu0 0.0
      %311 = vmatpush2.msra.mxu0 0.0
      %312 = vmatprep.subr.mxu0 0.0
      %313 = vmatpush2.msra.mxu0 0.0
      %314 = vmatprep.subr.mxu0 0.0
      %315 = vmatpush2.msra.mxu0 0.0
      %316 = vmatprep.mubr.f32.mxu0 0.0
      %317 = vmatmul.mubr.f32.gmra.mxu0 %v250
      %v318 = vpop.f32.mrf.mxu0
      %v319 = vadd.f32 0.0, %v318
      %v320 = vpop.f32.mrf.mxu0
      %321 = vdwg.mxu0
      %323 = vrot.lane.b32.xlu0 %v319, 120
      %v324 = vpop.permute.xlu0 %323
      %v326 = vadd.f32 %v244, %v324
      %v327 = vld [vmem:[%s2] sm:$0xff]
      %329 = vset.pattern.permute.xlu0 0
      %330 = vperm.xlu0 %329, %v327
      %v331 = vpop.permute.xlu0 %330
      %v333 = vadd.f32 %v326, %v331
      %vm334 = vcmask 523264
      %335 = vst.msk [vmem:[%s168] sm:$0xff] %vm334, %v333
      %p336 = scmp.lt.s32.totalorder %s14, 1
      %s337 = scalar_select %p336, %s14, 1
      %s338 = smul.addr %s337, 8
      %s339 = scalar_lea.vmem %s3, %s338
      // Predicated region
      $region33: #{conv_reg_forward.1} parent=31 // pred_check
        %p340 = pneg %p100
      $region34: #{conv_reg_forward.1} parent=31 // pred_check_branch
        %342 = sbr.rel (%p340) target = $region36
      $region35: #{conv_reg_forward.1} parent=31 // pred_region
        _
      $region36: #{conv_reg_forward.1} parent=31 // pred_fallthru
        _
    $region32: #{conv_reg_forward.1} parent=5 // pred_fallthru
      _
    %p343 = scmp.le.s32.totalorder 2, %s9
    // Predicated region
    $region37: #{conv_reg_forward.1} parent=5 // pred_check
      %p344 = pneg %p343
    $region38: #{conv_reg_forward.1} parent=5 // pred_check_branch
      %346 = sbr.rel (%p344) target = $region40
    $region39: #{conv_reg_forward.1} parent=5 // pred_region
      %s347 = ssub.s32 %s9, 2
      // Predicated region
      $region41: #{conv_reg_forward.1} parent=39 // pred_check
        %p348 = pneg %p106
      $region42: #{conv_reg_forward.1} parent=39 // pred_check_branch
        %350 = sbr.rel (%p348) target = $region44
      $region43: #{conv_reg_forward.1} parent=39 // pred_region
        %p351 = scmp.lt.s32.totalorder %s15, 1
        %s352 = scalar_select %p351, %s15, 1
        %s353 = smul.addr %s352, 8
        %s354 = scalar_lea.vmem %s3, %s353
      $region44: #{conv_reg_forward.1} parent=39 // pred_fallthru
        _
    $region40: #{conv_reg_forward.1} parent=5 // pred_fallthru
      _
  $region6: #{conv_reg_forward.1} parent=0 // loop_footer
    %s13 = sadd.s32 1, %s9
  $region7: #{conv_reg_forward.1} parent=0 // loop_footer_branch
    %8 = sbr.rel target = $region3
  $region8: #{conv_reg_forward.1} parent=0 // loop_exit
    _

</llo_original>
